<compile_context>
chip_gen: v7x
topology: tpu7x:2x2x1
jax: 0.10.0
libtpu: 0.0.40
codegen_flags: <defaults>
</compile_context>

<pallas_src>
import functools

import jax
import jax.numpy as jnp
from jax.experimental import pallas as pl
from jax.experimental.pallas import tpu as pltpu

LANE = 128     # TPU lane width (last dim)
SUBLANE = 8    # TPU sublane width (second-to-last dim, f32)


def _cdiv(a, b):
    return -(-a // b)


def _round_up(n, m):
    return ((n + m - 1) // m) * m


def _choose_batch_tiling(B, block_b, min_split=256):
    """Balanced batch tiling: minimal padding, >=2 tiles once B is large."""
    if B < min_split:
        n_tiles = 1
    else:
        n_tiles = max(_cdiv(B, block_b), 2)   # >=2 so v7x's 2nd TC gets work
    TB = _round_up(_cdiv(B, n_tiles), SUBLANE)
    B_pad = n_tiles * TB
    return TB, B_pad, n_tiles


def linear_decoder_kernel(x_ref, w1_ref, b1_ref, w2_ref, b2_ref, w3_ref, b3_ref,
                          out_ref):
    """One (TB, latent) -> (TB, out_pad) batch tile of the 3-layer MLP."""
    # Biases read once per body (broadcast hoisted).
    b1 = b1_ref[...]
    b2 = b2_ref[...]
    b3 = b3_ref[...]

    # fc1 + ReLU — kept fully f32 (K = latent = 3, cost negligible; preserves
    # the latent-input precision).  f32 accumulation everywhere.
    h = jnp.dot(x_ref[...], w1_ref[...], preferred_element_type=jnp.float32)
    h = jnp.maximum(h + b1, 0.0)

    # fc2 + ReLU — weights are pre-cast (bf16 on the fast path); only the
    # activations get cast per tile.
    h = jnp.dot(h.astype(w2_ref.dtype), w2_ref[...],
                preferred_element_type=jnp.float32)
    h = jnp.maximum(h + b2, 0.0)

    # fc3 (no activation)
    h = jnp.dot(h.astype(w3_ref.dtype), w3_ref[...],
                preferred_element_type=jnp.float32)
    out_ref[...] = (h + b3).astype(out_ref.dtype)


def linear_decoder_forward(x, padded_params, *, block_b=512,
                           out_dtype=jnp.float32, flatten_output=False):
    """x: (B, latent_dim) -> (B, seq_len, input_size) (module semantics).

    flatten_output=True returns the lane-friendlier (B, seq_len*input_size)
    slab, letting the consumer fold the last-dim=2 reshape into its own op.
    out_dtype=jnp.bfloat16 halves output HBM writeback when downstream allows.
    """
    p = padded_params
    w1, b1, w2, b2, w3, b3 = p["w1"], p["b1"], p["w2"], p["b2"], p["w3"], p["b3"]
    seq_len, input_size = p["seq_len"], p["input_size"]
    out_dim = seq_len * input_size
    latent = w1.shape[0]
    h_pad = w1.shape[1]
    out_pad = w3.shape[1]

    B = x.shape[0]
    TB, B_pad, n_tiles = _choose_batch_tiling(B, block_b)
    if B_pad != B:
        x = jnp.pad(x, ((0, B_pad - B), (0, 0)))  # zero rows, sliced off below

    grid = (n_tiles,)

    flops = 2 * B_pad * (latent * h_pad + h_pad * h_pad + h_pad * out_pad)
    bytes_accessed = (x.size * x.dtype.itemsize
                      + sum(a.size * a.dtype.itemsize
                            for a in (w1, b1, w2, b2, w3, b3))
                      + B_pad * out_pad * jnp.dtype(out_dtype).itemsize)

    out = pl.pallas_call(
        linear_decoder_kernel,
        out_shape=jax.ShapeDtypeStruct((B_pad, out_pad), out_dtype),
        grid=grid,
        in_specs=[
            pl.BlockSpec((TB, latent), lambda i: (i, 0)),   # x: tiled over batch
            pl.BlockSpec(w1.shape, lambda i: (0, 0)),       # weights/biases resident
            pl.BlockSpec(b1.shape, lambda i: (0, 0)),
            pl.BlockSpec(w2.shape, lambda i: (0, 0)),
            pl.BlockSpec(b2.shape, lambda i: (0, 0)),
            pl.BlockSpec(w3.shape, lambda i: (0, 0)),
            pl.BlockSpec(b3.shape, lambda i: (0, 0)),
        ],
        out_specs=pl.BlockSpec((TB, out_pad), lambda i: (i, 0)),
        compiler_params=pltpu.CompilerParams(
            dimension_semantics=("parallel",)),
        cost_estimate=pl.CostEstimate(flops=flops, transcendentals=0,
                                      bytes_accessed=bytes_accessed),
    )(x, w1, b1, w2, b2, w3, b3)

    # Drop batch padding (<= 7 rows per tile with balanced tiling) and the
    # zero-padded output columns.
    out = out[:B, :out_dim]
    if flatten_output:
        return out
    return out.reshape(B, seq_len, input_size)


def init_params(key, latent_dim=3, hidden_size=100, seq_len=30, input_size=2):
    """PyTorch-style uniform fan-in init; logical (unpadded) shapes, f32."""
    k1, k2, k3, k4, k5, k6 = jax.random.split(key, 6)

    def uni(k, shape, fan_in):
        bound = 1.0 / jnp.sqrt(jnp.float32(fan_in))
        return jax.random.uniform(k, shape, jnp.float32, -bound, bound)

    out_dim = seq_len * input_size
    return {
        # stored as (in, out) so the kernel computes x @ W + b
        "w1": uni(k1, (latent_dim, hidden_size), latent_dim),
        "b1": uni(k2, (1, hidden_size), latent_dim),
        "w2": uni(k3, (hidden_size, hidden_size), hidden_size),
        "b2": uni(k4, (1, hidden_size), hidden_size),
        "w3": uni(k5, (hidden_size, out_dim), hidden_size),
        "b3": uni(k6, (1, out_dim), hidden_size),
        "seq_len": seq_len,
        "input_size": input_size,
    }


def pad_params_for_tpu(params, mxu_dtype=jnp.bfloat16):
    """Zero-pad feature dims to 128-lane multiples (hidden 100->128, out 60->128)
    and pre-cast the big fc2/fc3 weights to the MXU dtype.

    fc1 weight and all biases stay f32: fc1 runs in f32 (K=3, negligible) and
    the bias-add/ReLU epilogue is f32 regardless of MXU operand dtype.
    Do NOT pad beyond 128: the kernel is DMA/overhead-bound, not MXU-bound.
    """
    w1, b1, w2, b2, w3, b3 = (params["w1"], params["b1"], params["w2"],
                              params["b2"], params["w3"], params["b3"])
    latent, hidden = w1.shape
    out_dim = w3.shape[1]
    h_pad = _round_up(hidden, LANE)
    o_pad = _round_up(out_dim, LANE)

    def pad2(a, rows, cols):
        return jnp.pad(a, ((0, rows - a.shape[0]), (0, cols - a.shape[1])))

    return {
        "w1": pad2(w1, latent, h_pad),                       # f32
        "b1": pad2(b1, 1, h_pad),                            # f32
        "w2": pad2(w2, h_pad, h_pad).astype(mxu_dtype),      # pre-cast, resident
        "b2": pad2(b2, 1, h_pad),                            # f32
        "w3": pad2(w3, h_pad, o_pad).astype(mxu_dtype),      # pre-cast, resident
        "b3": pad2(b3, 1, o_pad),                            # f32
        "seq_len": params["seq_len"],
        "input_size": params["input_size"],
    }


def reference_forward(x, params):
    """Plain-JAX reference mirroring the PyTorch module."""
    h = jnp.maximum(x @ params["w1"] + params["b1"], 0.0)
    h = jnp.maximum(h @ params["w2"] + params["b2"], 0.0)
    h = h @ params["w3"] + params["b3"]
    return h.reshape(-1, params["seq_len"], params["input_size"])


if __name__ == "__main__":
    key = jax.random.PRNGKey(0)
    kp, kx1, kx2 = jax.random.split(key, 3)

    latent_dim, hidden_size, seq_len, input_size = 3, 100, 30, 2
    params = init_params(kp, latent_dim, hidden_size, seq_len, input_size)
    padded_f32 = pad_params_for_tpu(params, mxu_dtype=jnp.float32)
    padded_bf16 = pad_params_for_tpu(params, mxu_dtype=jnp.bfloat16)

    # Small batch (module's typical use).
    batch = 8
    x = jax.random.normal(kx1, (batch, latent_dim), jnp.float32)
    ref = reference_forward(x, params)

    # 1) Strict f32 path — exact vs the plain-JAX reference.
    out = jax.block_until_ready(linear_decoder_forward(x, padded_f32))
    assert out.shape == (batch, seq_len, input_size), out.shape
    assert jnp.allclose(out, ref, atol=1e-5, rtol=1e-5), "f32 mismatch vs reference"

    # 2) Default bf16-MXU path (pre-cast fc2/fc3 weights, f32 fc1 + epilogues).
    out_bf16 = jax.block_until_ready(linear_decoder_forward(x, padded_bf16))
    assert out_bf16.shape == (batch, seq_len, input_size), out_bf16.shape
    assert jnp.allclose(out_bf16, ref, atol=5e-2, rtol=5e-2), "bf16 mismatch vs reference"

    # 3) Larger, awkward batch: balanced 2-tile grid (TB=152, B_pad=304).
    batch2 = 300
    x2 = jax.random.normal(kx2, (batch2, latent_dim), jnp.float32)
    ref2 = reference_forward(x2, params)
    out2 = jax.block_until_ready(
        linear_decoder_forward(x2, padded_f32, block_b=512))
    assert out2.shape == (batch2, seq_len, input_size), out2.shape
    assert jnp.allclose(out2, ref2, atol=1e-5, rtol=1e-5), "grid-path mismatch vs reference"

    # 4) bf16 output + flattened lane-dense slab (consumer-friendly fast path).
    out3 = jax.block_until_ready(
        linear_decoder_forward(x2, padded_bf16, block_b=512,
                               out_dtype=jnp.bfloat16, flatten_output=True))
    assert out3.shape == (batch2, seq_len * input_size), out3.shape
    assert jnp.allclose(out3.astype(jnp.float32),
                        ref2.reshape(batch2, -1), atol=5e-2, rtol=5e-2), \
        "bf16-out mismatch vs reference"

    print("KERNEL_OK")
</pallas_src>

<mosaic_0001>
module attributes {stable_mosaic.version = 11 : i64} {
  func.func @linear_decoder_kernel(%arg0: i32, %arg1: memref<8x3xf32, #tpu.memory_space<vmem>>, %arg2: memref<3x128xf32, #tpu.memory_space<vmem>>, %arg3: memref<1x128xf32, #tpu.memory_space<vmem>>, %arg4: memref<128x128xf32, #tpu.memory_space<vmem>>, %arg5: memref<1x128xf32, #tpu.memory_space<vmem>>, %arg6: memref<128x128xf32, #tpu.memory_space<vmem>>, %arg7: memref<1x128xf32, #tpu.memory_space<vmem>>, %arg8: memref<8x128xf32, #tpu.memory_space<vmem>>) attributes {dimension_semantics = [#tpu.dimension_semantics<parallel>], iteration_bounds = array<i64: 1>, scalar_prefetch = 0 : i64, scratch_operands = 0 : i64, tpu.core_type = #tpu.core_type<tc>, window_params = [{transform_indices = @transform_0, window_bounds = array<i64: 8, 3>}, {pipeline_mode = #tpu.pipeline_mode<synchronous>, transform_indices = @transform_1, window_bounds = array<i64: 3, 128>}, {pipeline_mode = #tpu.pipeline_mode<synchronous>, transform_indices = @transform_2, window_bounds = array<i64: 1, 128>}, {pipeline_mode = #tpu.pipeline_mode<synchronous>, transform_indices = @transform_3, window_bounds = array<i64: 128, 128>}, {pipeline_mode = #tpu.pipeline_mode<synchronous>, transform_indices = @transform_4, window_bounds = array<i64: 1, 128>}, {pipeline_mode = #tpu.pipeline_mode<synchronous>, transform_indices = @transform_5, window_bounds = array<i64: 128, 128>}, {pipeline_mode = #tpu.pipeline_mode<synchronous>, transform_indices = @transform_6, window_bounds = array<i64: 1, 128>}, {transform_indices = @transform_7, window_bounds = array<i64: 8, 128>}]} {
    %c0 = arith.constant 0 : index
    %c0_0 = arith.constant 0 : index
    %0 = vector.load %arg3[%c0, %c0_0] : memref<1x128xf32, #tpu.memory_space<vmem>>, vector<1x128xf32>
    %c0_1 = arith.constant 0 : index
    %c0_2 = arith.constant 0 : index
    %1 = vector.load %arg5[%c0_1, %c0_2] : memref<1x128xf32, #tpu.memory_space<vmem>>, vector<1x128xf32>
    %c0_3 = arith.constant 0 : index
    %c0_4 = arith.constant 0 : index
    %2 = vector.load %arg7[%c0_3, %c0_4] : memref<1x128xf32, #tpu.memory_space<vmem>>, vector<1x128xf32>
    %c0_5 = arith.constant 0 : index
    %c0_6 = arith.constant 0 : index
    %3 = vector.load %arg1[%c0_5, %c0_6] : memref<8x3xf32, #tpu.memory_space<vmem>>, vector<8x3xf32>
    %c0_7 = arith.constant 0 : index
    %c0_8 = arith.constant 0 : index
    %4 = vector.load %arg2[%c0_7, %c0_8] : memref<3x128xf32, #tpu.memory_space<vmem>>, vector<3x128xf32>
    %cst = arith.constant dense<0.000000e+00> : vector<8x128xf32>
    %5 = tpu.matmul %3, %4, %cst {dimension_numbers = #tpu.dot_dimension_numbers<[1], [0], [0], [1], [0, 0, 1, 1], [], []>} : vector<8x3xf32>, vector<3x128xf32>, vector<8x128xf32> -> vector<8x128xf32>
    %6 = vector.broadcast %0 : vector<1x128xf32> to vector<8x128xf32>
    %7 = arith.addf %5, %6 : vector<8x128xf32>
    %cst_9 = arith.constant 0.000000e+00 : f32
    %8 = vector.broadcast %cst_9 : f32 to vector<8x128xf32>
    %9 = arith.maximumf %7, %8 : vector<8x128xf32>
    %c0_10 = arith.constant 0 : index
    %c0_11 = arith.constant 0 : index
    %10 = vector.load %arg4[%c0_10, %c0_11] : memref<128x128xf32, #tpu.memory_space<vmem>>, vector<128x128xf32>
    %cst_12 = arith.constant dense<0.000000e+00> : vector<8x128xf32>
    %11 = tpu.matmul %9, %10, %cst_12 {dimension_numbers = #tpu.dot_dimension_numbers<[1], [0], [0], [1], [0, 0, 1, 1], [], []>} : vector<8x128xf32>, vector<128x128xf32>, vector<8x128xf32> -> vector<8x128xf32>
    %12 = vector.broadcast %1 : vector<1x128xf32> to vector<8x128xf32>
    %13 = arith.addf %11, %12 : vector<8x128xf32>
    %cst_13 = arith.constant 0.000000e+00 : f32
    %14 = vector.broadcast %cst_13 : f32 to vector<8x128xf32>
    %15 = arith.maximumf %13, %14 : vector<8x128xf32>
    %c0_14 = arith.constant 0 : index
    %c0_15 = arith.constant 0 : index
    %16 = vector.load %arg6[%c0_14, %c0_15] : memref<128x128xf32, #tpu.memory_space<vmem>>, vector<128x128xf32>
    %cst_16 = arith.constant dense<0.000000e+00> : vector<8x128xf32>
    %17 = tpu.matmul %15, %16, %cst_16 {dimension_numbers = #tpu.dot_dimension_numbers<[1], [0], [0], [1], [0, 0, 1, 1], [], []>} : vector<8x128xf32>, vector<128x128xf32>, vector<8x128xf32> -> vector<8x128xf32>
    %18 = vector.broadcast %2 : vector<1x128xf32> to vector<8x128xf32>
    %19 = arith.addf %17, %18 : vector<8x128xf32>
    %c0_17 = arith.constant 0 : index
    %c0_18 = arith.constant 0 : index
    %20 = vector.load %arg8[%c0_17, %c0_18] : memref<8x128xf32, #tpu.memory_space<vmem>>, vector<8x128xf32>
    tpu.vector_store %arg8[%c0_17, %c0_18], %19 {strides = array<i32>} : memref<8x128xf32, #tpu.memory_space<vmem>>, vector<8x128xf32>,
    return
  }
  func.func @transform_0(%arg0: i32) -> (i32, i32) {
    %c0_i32 = arith.constant 0 : i32
    %c0_i32_0 = arith.constant 0 : i32
    return %arg0, %c0_i32 : i32, i32
  }
  func.func @transform_1(%arg0: i32) -> (i32, i32) {
    %c0_i32 = arith.constant 0 : i32
    %c0_i32_0 = arith.constant 0 : i32
    %c0_i32_1 = arith.constant 0 : i32
    return %c0_i32, %c0_i32_0 : i32, i32
  }
  func.func @transform_2(%arg0: i32) -> (i32, i32) {
    %c0_i32 = arith.constant 0 : i32
    %c0_i32_0 = arith.constant 0 : i32
    %c0_i32_1 = arith.constant 0 : i32
    return %c0_i32, %c0_i32_0 : i32, i32
  }
  func.func @transform_3(%arg0: i32) -> (i32, i32) {
    %c0_i32 = arith.constant 0 : i32
    %c0_i32_0 = arith.constant 0 : i32
    %c0_i32_1 = arith.constant 0 : i32
    return %c0_i32, %c0_i32_0 : i32, i32
  }
  func.func @transform_4(%arg0: i32) -> (i32, i32) {
    %c0_i32 = arith.constant 0 : i32
    %c0_i32_0 = arith.constant 0 : i32
    %c0_i32_1 = arith.constant 0 : i32
    return %c0_i32, %c0_i32_0 : i32, i32
  }
  func.func @transform_5(%arg0: i32) -> (i32, i32) {
    %c0_i32 = arith.constant 0 : i32
    %c0_i32_0 = arith.constant 0 : i32
    %c0_i32_1 = arith.constant 0 : i32
    return %c0_i32, %c0_i32_0 : i32, i32
  }
  func.func @transform_6(%arg0: i32) -> (i32, i32) {
    %c0_i32 = arith.constant 0 : i32
    %c0_i32_0 = arith.constant 0 : i32
    %c0_i32_1 = arith.constant 0 : i32
    return %c0_i32, %c0_i32_0 : i32, i32
  }
  func.func @transform_7(%arg0: i32) -> (i32, i32) {
    %c0_i32 = arith.constant 0 : i32
    %c0_i32_0 = arith.constant 0 : i32
    return %arg0, %c0_i32 : i32, i32
  }
}

</mosaic_0001>

<llo_original>
// kernel: tpu_custom_call.1
$region0: #{tpu_custom_call.1}
  #allocation0 [shape = 'u32[]', space=smem, size = 0x4, offset = 0x4, fixed_abs, tag = 'smem constant byte address 0x4 - core index']
  #allocation1 [shape = 'u32[144,128]{1,0:T(1,128)}', space=vmem, size = 0x12000, scoped, tag = 'internal scratch']
  %s0 = inlined_call_operand.vmem [shape: f32[8,3], index: 0, kind: input, shape index: {}]
  %s1 = inlined_call_operand.vmem [shape: f32[3,128], index: 1, kind: input, shape index: {}]
  %s2 = inlined_call_operand.vmem [shape: f32[1,128], index: 2, kind: input, shape index: {}]
  %s3 = inlined_call_operand.hbm [shape: f32[128,128], index: 3, kind: input, shape index: {}]
  %s4 = inlined_call_operand.vmem [shape: f32[1,128], index: 4, kind: input, shape index: {}]
  %s5 = inlined_call_operand.hbm [shape: f32[128,128], index: 5, kind: input, shape index: {}]
  %s6 = inlined_call_operand.vmem [shape: f32[1,128], index: 6, kind: input, shape index: {}]
  %s7 = inlined_call_operand.hbm [shape: f32[8,128], index: 7, kind: output, shape index: {}]
  %s8 = sld [smem:[#allocation0]]
  $region46: #{tpu_custom_call.1} parent=0
    _
  %s10 = ssub.s32 1, %s8
  %s11 = scalar_select 0, %s10, %s8
  $region1: #{tpu_custom_call.1} parent=0
    #allocation2 [shape = 'u8[65536]{0}', space=vmem, size = 0x10000, scoped, tag = 'input window, operand 3, single buffered']
    #allocation3 [shape = 's32[1]{0}', space=sflag, size = 0x4, scoped, tag = 'scoped memory for tpu_custom_call.1']
    #allocation4 [shape = 's32[1]{0}', space=sflag, size = 0x4, scoped, tag = 'scoped memory for tpu_custom_call.1']
    #allocation5 [shape = 'u8[65536]{0}', space=vmem, size = 0x10000, scoped, tag = 'input window, operand 5, single buffered']
    #allocation6 [shape = 's32[1]{0}', space=sflag, size = 0x4, scoped, tag = 'scoped memory for tpu_custom_call.1']
    #allocation7 [shape = 'u8[4096]{0}', space=vmem, size = 0x1000, scoped, tag = 'output window, operand 0, single buffered']
    %12 = vsyncpa [#allocation3], 0
    %13 = vsyncpa [#allocation6], 0
    %14 = vsyncpa [#allocation4], 0
    // Predicated region
    $region2: #{tpu_custom_call.1} parent=1 // pred_check
      _
    $region3: #{tpu_custom_call.1} parent=1 // pred_check_branch
      %16 = sbr.rel (0) target = $region5
    $region4: #{tpu_custom_call.1} parent=1 // pred_region
      _
    $region5: #{tpu_custom_call.1} parent=1 // pred_fallthru
      _
    // Predicated region
    $region6: #{tpu_custom_call.1} parent=1 // pred_check
      _
    $region7: #{tpu_custom_call.1} parent=1 // pred_check_branch
      %18 = sbr.rel (0) target = $region9
    $region8: #{tpu_custom_call.1} parent=1 // pred_region
      _
    $region9: #{tpu_custom_call.1} parent=1 // pred_fallthru
      _
    // Predicated region
    $region10: #{tpu_custom_call.1} parent=1 // pred_check
      _
    $region11: #{tpu_custom_call.1} parent=1 // pred_check_branch
      %20 = sbr.rel (0) target = $region13
    $region12: #{tpu_custom_call.1} parent=1 // pred_region
      _
    $region13: #{tpu_custom_call.1} parent=1 // pred_fallthru
      _
    // Predicated region
    $region14: #{tpu_custom_call.1} parent=1 // pred_check
      _
    $region15: #{tpu_custom_call.1} parent=1 // pred_check_branch
      %22 = sbr.rel (0) target = $region17
    $region16: #{tpu_custom_call.1} parent=1 // pred_region
      %s24 = ssub.s32 2048, 2048
      %25 = vsyncadd [#allocation3], %s24
      %s26 = sshll.u32 [#allocation2], 4
      %s27 = int_to_ptr.vmem [resolvable:$true] %s26
      %32 = dma.hbm_to_vmem [thread:$0]  %s3, 2048, %s27, [#allocation3], 128, 128, 8
    $region17: #{tpu_custom_call.1} parent=1 // pred_fallthru
      _
    // Predicated region
    $region18: #{tpu_custom_call.1} parent=1 // pred_check
      _
    $region19: #{tpu_custom_call.1} parent=1 // pred_check_branch
      %34 = sbr.rel (0) target = $region21
    $region20: #{tpu_custom_call.1} parent=1 // pred_region
      _
    $region21: #{tpu_custom_call.1} parent=1 // pred_fallthru
      _
    // Predicated region
    $region22: #{tpu_custom_call.1} parent=1 // pred_check
      _
    $region23: #{tpu_custom_call.1} parent=1 // pred_check_branch
      %36 = sbr.rel (0) target = $region25
    $region24: #{tpu_custom_call.1} parent=1 // pred_region
      %s38 = ssub.s32 2048, 2048
      %39 = vsyncadd [#allocation6], %s38
      %s40 = sshll.u32 [#allocation5], 4
      %s41 = int_to_ptr.vmem [resolvable:$true] %s40
      %46 = dma.hbm_to_vmem [thread:$0]  %s5, 2048, %s41, [#allocation6], 128, 128, 8
    $region25: #{tpu_custom_call.1} parent=1 // pred_fallthru
      _
    // Predicated region
    $region26: #{tpu_custom_call.1} parent=1 // pred_check
      _
    $region27: #{tpu_custom_call.1} parent=1 // pred_check_branch
      %48 = sbr.rel (0) target = $region29
    $region28: #{tpu_custom_call.1} parent=1 // pred_region
      _
    $region29: #{tpu_custom_call.1} parent=1 // pred_fallthru
      _
    // Predicated region
    $region30: #{tpu_custom_call.1} parent=1 // pred_check
      _
    $region31: #{tpu_custom_call.1} parent=1 // pred_check_branch
      %50 = sbr.rel (0) target = $region33
    $region32: #{tpu_custom_call.1} parent=1 // pred_region
      %51 = dma.done [#allocation3], 2048
    $region33: #{tpu_custom_call.1} parent=1 // pred_fallthru
      _
    // Predicated region
    $region34: #{tpu_custom_call.1} parent=1 // pred_check
      _
    $region35: #{tpu_custom_call.1} parent=1 // pred_check_branch
      %53 = sbr.rel (0) target = $region37
    $region36: #{tpu_custom_call.1} parent=1 // pred_region
      %54 = dma.done [#allocation6], 2048
    $region37: #{tpu_custom_call.1} parent=1 // pred_fallthru
      _
    %v55 = vld [vmem:[%s2] sm:$0x1]
    %v56 = vld [vmem:[%s4] sm:$0x1]
    %v57 = vld [vmem:[%s6] sm:$0x1]
    %v58 = vld [vmem:[%s0] sm:$0xff]
    %v59 = vld [vmem:[%s1] sm:$0x7]
    %v61 = vlaneseq
    %v62 = vshrl.u32 %v61, 7
    %v63 = vsub.s32 0, %v62
    %v64 = vrot.slane %v55, %v63
    %vm66 = vcmask 23552
    %v68 = vsel %vm66, %v58, 0
    %vm70 = vcmask 1042432
    %v72 = vsel %vm70, %v59, 0
    %74 = vmatprep.subr.mxu0 0.0
    %75 = vmatpush1.msra.mxu0 %v72
    %76 = vmatprep.subr.mxu0 0.0
    %77 = vmatpush1.msra.mxu0 0.0
    %78 = vmatprep.subr.mxu0 0.0
    %79 = vmatpush1.msra.mxu0 0.0
    %80 = vmatprep.subr.mxu0 0.0
    %81 = vmatpush1.msra.mxu0 0.0
    %82 = vmatprep.subr.mxu0 0.0
    %83 = vmatpush1.msra.mxu0 0.0
    %84 = vmatprep.subr.mxu0 0.0
    %85 = vmatpush1.msra.mxu0 0.0
    %86 = vmatprep.subr.mxu0 0.0
    %87 = vmatpush1.msra.mxu0 0.0
    %88 = vmatprep.subr.mxu0 0.0
    %89 = vmatpush1.msra.mxu0 0.0
    %90 = vmatprep.subr.mxu0 0.0
    %91 = vmatpush1.msra.mxu0 0.0
    %92 = vmatprep.subr.mxu0 0.0
    %93 = vmatpush1.msra.mxu0 0.0
    %94 = vmatprep.subr.mxu0 0.0
    %95 = vmatpush1.msra.mxu0 0.0
    %96 = vmatprep.subr.mxu0 0.0
    %97 = vmatpush1.msra.mxu0 0.0
    %98 = vmatprep.subr.mxu0 0.0
    %99 = vmatpush1.msra.mxu0 0.0
    %100 = vmatprep.subr.mxu0 0.0
    %101 = vmatpush1.msra.mxu0 0.0
    %102 = vmatprep.subr.mxu0 0.0
    %103 = vmatpush1.msra.mxu0 0.0
    %104 = vmatprep.subr.mxu0 0.0
    %105 = vmatpush1.msra.mxu0 0.0
    %106 = vmatprep.subr.mxu0 0.0
    %107 = vmatpush1.msra.mxu0 0.0
    %108 = vmatprep.subr.mxu0 0.0
    %109 = vmatpush1.msra.mxu0 0.0
    %110 = vmatprep.subr.mxu0 0.0
    %111 = vmatpush1.msra.mxu0 0.0
    %112 = vmatprep.subr.mxu0 0.0
    %113 = vmatpush1.msra.mxu0 0.0
    %114 = vmatprep.subr.mxu0 0.0
    %115 = vmatpush1.msra.mxu0 0.0
    %116 = vmatprep.subr.mxu0 0.0
    %117 = vmatpush1.msra.mxu0 0.0
    %118 = vmatprep.subr.mxu0 0.0
    %119 = vmatpush1.msra.mxu0 0.0
    %120 = vmatprep.subr.mxu0 0.0
    %121 = vmatpush1.msra.mxu0 0.0
    %122 = vmatprep.subr.mxu0 0.0
    %123 = vmatpush1.msra.mxu0 0.0
    %124 = vmatprep.subr.mxu0 0.0
    %125 = vmatpush1.msra.mxu0 0.0
    %126 = vmatprep.subr.mxu0 0.0
    %127 = vmatpush1.msra.mxu0 0.0
    %128 = vmatprep.subr.mxu0 0.0
    %129 = vmatpush1.msra.mxu0 0.0
    %130 = vmatprep.subr.mxu0 0.0
    %131 = vmatpush1.msra.mxu0 0.0
    %132 = vmatprep.subr.mxu0 0.0
    %133 = vmatpush1.msra.mxu0 0.0
    %134 = vmatprep.subr.mxu0 0.0
    %135 = vmatpush1.msra.mxu0 0.0
    %136 = vmatprep.subr.mxu0 0.0
    %137 = vmatpush1.msra.mxu0 0.0
    %138 = vmatprep.mubr.f32.mxu0 0.0
    %139 = vmatmul.mubr.f32.gmra.mrb[0].mxu0 %v68
    %v140 = vpop.f32.mrb[0].mxu0
    %v141 = vadd.f32 %v64, %v140
    %v142 = vpop.f32.mrb[0].mxu0
    %143 = vdwg.mxu0
    %v144 = vmax.f32 %v141, 0.0
    %v145 = vld [vmem:[#allocation2] sm:$0xff]
    %v146 = vld [vmem:[#allocation2 + $0x8] sm:$0xff]
    %v147 = vld [vmem:[#allocation2 + $0x10] sm:$0xff]
    %v148 = vld [vmem:[#allocation2 + $0x18] sm:$0xff]
    %v149 = vld [vmem:[#allocation2 + $0x20] sm:$0xff]
    %v150 = vld [vmem:[#allocation2 + $0x28] sm:$0xff]
    %v151 = vld [vmem:[#allocation2 + $0x30] sm:$0xff]
    %v152 = vld [vmem:[#allocation2 + $0x38] sm:$0xff]
    %v153 = vld [vmem:[#allocation2 + $0x40] sm:$0xff]
    %v154 = vld [vmem:[#allocation2 + $0x48] sm:$0xff]
    %v155 = vld [vmem:[#allocation2 + $0x50] sm:$0xff]
    %v156 = vld [vmem:[#allocation2 + $0x58] sm:$0xff]
    %v157 = vld [vmem:[#allocation2 + $0x60] sm:$0xff]
    %v158 = vld [vmem:[#allocation2 + $0x68] sm:$0xff]
    %v159 = vld [vmem:[#allocation2 + $0x70] sm:$0xff]
    %v160 = vld [vmem:[#allocation2 + $0x78] sm:$0xff]
    %v162 = vlaneseq
    %v163 = vshrl.u32 %v162, 7
    %v164 = vsub.s32 0, %v163
    %v165 = vrot.slane %v56, %v164
    %167 = vmatprep.subr.mxu0 0.0
    %168 = vmatpush1.msra.mxu0 %v145
    %169 = vmatprep.subr.mxu0 0.0
    %170 = vmatpush1.msra.mxu0 %v146
    %171 = vmatprep.subr.mxu0 0.0
    %172 = vmatpush1.msra.mxu0 %v147
    %173 = vmatprep.subr.mxu0 0.0
    %174 = vmatpush1.msra.mxu0 %v148
    %175 = vmatprep.subr.mxu0 0.0
    %176 = vmatpush1.msra.mxu0 %v149
    %177 = vmatprep.subr.mxu0 0.0
    %178 = vmatpush1.msra.mxu0 %v150
    %179 = vmatprep.subr.mxu0 0.0
    %180 = vmatpush1.msra.mxu0 %v151
    %181 = vmatprep.subr.mxu0 0.0
    %182 = vmatpush1.msra.mxu0 %v152
    %183 = vmatprep.subr.mxu0 0.0
    %184 = vmatpush1.msra.mxu0 %v153
    %185 = vmatprep.subr.mxu0 0.0
    %186 = vmatpush1.msra.mxu0 %v154
    %187 = vmatprep.subr.mxu0 0.0
    %188 = vmatpush1.msra.mxu0 %v155
    %189 = vmatprep.subr.mxu0 0.0
    %190 = vmatpush1.msra.mxu0 %v156
    %191 = vmatprep.subr.mxu0 0.0
    %192 = vmatpush1.msra.mxu0 %v157
    %193 = vmatprep.subr.mxu0 0.0
    %194 = vmatpush1.msra.mxu0 %v158
    %195 = vmatprep.subr.mxu0 0.0
    %196 = vmatpush1.msra.mxu0 %v159
    %197 = vmatprep.subr.mxu0 0.0
    %198 = vmatpush1.msra.mxu0 %v160
    %199 = vmatprep.subr.mxu0 0.0
    %200 = vmatpush1.msra.mxu0 0.0
    %201 = vmatprep.subr.mxu0 0.0
    %202 = vmatpush1.msra.mxu0 0.0
    %203 = vmatprep.subr.mxu0 0.0
    %204 = vmatpush1.msra.mxu0 0.0
    %205 = vmatprep.subr.mxu0 0.0
    %206 = vmatpush1.msra.mxu0 0.0
    %207 = vmatprep.subr.mxu0 0.0
    %208 = vmatpush1.msra.mxu0 0.0
    %209 = vmatprep.subr.mxu0 0.0
    %210 = vmatpush1.msra.mxu0 0.0
    %211 = vmatprep.subr.mxu0 0.0
    %212 = vmatpush1.msra.mxu0 0.0
    %213 = vmatprep.subr.mxu0 0.0
    %214 = vmatpush1.msra.mxu0 0.0
    %215 = vmatprep.subr.mxu0 0.0
    %216 = vmatpush1.msra.mxu0 0.0
    %217 = vmatprep.subr.mxu0 0.0
    %218 = vmatpush1.msra.mxu0 0.0
    %219 = vmatprep.subr.mxu0 0.0
    %220 = vmatpush1.msra.mxu0 0.0
    %221 = vmatprep.subr.mxu0 0.0
    %222 = vmatpush1.msra.mxu0 0.0
    %223 = vmatprep.subr.mxu0 0.0
    %224 = vmatpush1.msra.mxu0 0.0
    %225 = vmatprep.subr.mxu0 0.0
    %226 = vmatpush1.msra.mxu0 0.0
    %227 = vmatprep.subr.mxu0 0.0
    %228 = vmatpush1.msra.mxu0 0.0
    %229 = vmatprep.subr.mxu0 0.0
    %230 = vmatpush1.msra.mxu0 0.0
    %231 = vmatprep.mubr.f32.mxu0 0.0
    %232 = vmatmul.mubr.f32.gmra.mrb[0].mxu0 %v144
    %v233 = vpop.f32.mrb[0].mxu0
    %v234 = vadd.f32 %v165, %v233
    %v235 = vpop.f32.mrb[0].mxu0
    %236 = vdwg.mxu0
    %v237 = vmax.f32 %v234, 0.0
    %v238 = vld [vmem:[#allocation5] sm:$0xff]
    %v239 = vld [vmem:[#allocation5 + $0x8] sm:$0xff]
    %v240 = vld [vmem:[#allocation5 + $0x10] sm:$0xff]
    %v241 = vld [vmem:[#allocation5 + $0x18] sm:$0xff]
    %v242 = vld [vmem:[#allocation5 + $0x20] sm:$0xff]
    %v243 = vld [vmem:[#allocation5 + $0x28] sm:$0xff]
    %v244 = vld [vmem:[#allocation5 + $0x30] sm:$0xff]
    %v245 = vld [vmem:[#allocation5 + $0x38] sm:$0xff]
    %v246 = vld [vmem:[#allocation5 + $0x40] sm:$0xff]
    %v247 = vld [vmem:[#allocation5 + $0x48] sm:$0xff]
    %v248 = vld [vmem:[#allocation5 + $0x50] sm:$0xff]
    %v249 = vld [vmem:[#allocation5 + $0x58] sm:$0xff]
    %v250 = vld [vmem:[#allocation5 + $0x60] sm:$0xff]
    %v251 = vld [vmem:[#allocation5 + $0x68] sm:$0xff]
    %v252 = vld [vmem:[#allocation5 + $0x70] sm:$0xff]
    %v253 = vld [vmem:[#allocation5 + $0x78] sm:$0xff]
    %v255 = vlaneseq
    %v256 = vshrl.u32 %v255, 7
    %v257 = vsub.s32 0, %v256
    %v258 = vrot.slane %v57, %v257
    %260 = vmatprep.subr.mxu0 0.0
    %261 = vmatpush1.msra.mxu0 %v238
    %262 = vmatprep.subr.mxu0 0.0
    %263 = vmatpush1.msra.mxu0 %v239
    %264 = vmatprep.subr.mxu0 0.0
    %265 = vmatpush1.msra.mxu0 %v240
    %266 = vmatprep.subr.mxu0 0.0
    %267 = vmatpush1.msra.mxu0 %v241
    %268 = vmatprep.subr.mxu0 0.0
    %269 = vmatpush1.msra.mxu0 %v242
    %270 = vmatprep.subr.mxu0 0.0
    %271 = vmatpush1.msra.mxu0 %v243
    %272 = vmatprep.subr.mxu0 0.0
    %273 = vmatpush1.msra.mxu0 %v244
    %274 = vmatprep.subr.mxu0 0.0
    %275 = vmatpush1.msra.mxu0 %v245
    %276 = vmatprep.subr.mxu0 0.0
    %277 = vmatpush1.msra.mxu0 %v246
    %278 = vmatprep.subr.mxu0 0.0
    %279 = vmatpush1.msra.mxu0 %v247
    %280 = vmatprep.subr.mxu0 0.0
    %281 = vmatpush1.msra.mxu0 %v248
    %282 = vmatprep.subr.mxu0 0.0
    %283 = vmatpush1.msra.mxu0 %v249
    %284 = vmatprep.subr.mxu0 0.0
    %285 = vmatpush1.msra.mxu0 %v250
    %286 = vmatprep.subr.mxu0 0.0
    %287 = vmatpush1.msra.mxu0 %v251
    %288 = vmatprep.subr.mxu0 0.0
    %289 = vmatpush1.msra.mxu0 %v252
    %290 = vmatprep.subr.mxu0 0.0
    %291 = vmatpush1.msra.mxu0 %v253
    %292 = vmatprep.subr.mxu0 0.0
    %293 = vmatpush1.msra.mxu0 0.0
    %294 = vmatprep.subr.mxu0 0.0
    %295 = vmatpush1.msra.mxu0 0.0
    %296 = vmatprep.subr.mxu0 0.0
    %297 = vmatpush1.msra.mxu0 0.0
    %298 = vmatprep.subr.mxu0 0.0
    %299 = vmatpush1.msra.mxu0 0.0
    %300 = vmatprep.subr.mxu0 0.0
    %301 = vmatpush1.msra.mxu0 0.0
    %302 = vmatprep.subr.mxu0 0.0
    %303 = vmatpush1.msra.mxu0 0.0
    %304 = vmatprep.subr.mxu0 0.0
    %305 = vmatpush1.msra.mxu0 0.0
    %306 = vmatprep.subr.mxu0 0.0
    %307 = vmatpush1.msra.mxu0 0.0
    %308 = vmatprep.subr.mxu0 0.0
    %309 = vmatpush1.msra.mxu0 0.0
    %310 = vmatprep.subr.mxu0 0.0
    %311 = vmatpush1.msra.mxu0 0.0
    %312 = vmatprep.subr.mxu0 0.0
    %313 = vmatpush1.msra.mxu0 0.0
    %314 = vmatprep.subr.mxu0 0.0
    %315 = vmatpush1.msra.mxu0 0.0
    %316 = vmatprep.subr.mxu0 0.0
    %317 = vmatpush1.msra.mxu0 0.0
    %318 = vmatprep.subr.mxu0 0.0
    %319 = vmatpush1.msra.mxu0 0.0
    %320 = vmatprep.subr.mxu0 0.0
    %321 = vmatpush1.msra.mxu0 0.0
    %322 = vmatprep.subr.mxu0 0.0
    %323 = vmatpush1.msra.mxu0 0.0
    %324 = vmatprep.mubr.f32.mxu0 0.0
    %325 = vmatmul.mubr.f32.gmra.mrb[0].mxu0 %v237
    %v326 = vpop.f32.mrb[0].mxu0
    %v327 = vadd.f32 %v258, %v326
    %v328 = vpop.f32.mrb[0].mxu0
    %329 = vdwg.mxu0
    %330 = vst [vmem:[#allocation7] sm:$0xff] %v327
    // Predicated region
    $region38: #{tpu_custom_call.1} parent=1 // pred_check
      _
    $region39: #{tpu_custom_call.1} parent=1 // pred_check_branch
      %332 = sbr.rel (0) target = $region41
    $region40: #{tpu_custom_call.1} parent=1 // pred_region
      %s334 = ssub.s32 128, 128
      %335 = vsyncadd [#allocation4], %s334
      %s337 = sshll.u32 [#allocation7], 4
      %s338 = int_to_ptr.vmem [resolvable:$true] %s337
      %340 = dma.vmem_to_hbm [thread:$0]  %s338, 128, %s7, [#allocation4]
    $region41: #{tpu_custom_call.1} parent=1 // pred_fallthru
      _
    // Predicated region
    $region42: #{tpu_custom_call.1} parent=1 // pred_check
      _
    $region43: #{tpu_custom_call.1} parent=1 // pred_check_branch
      %342 = sbr.rel (0) target = $region45
    $region44: #{tpu_custom_call.1} parent=1 // pred_region
      %343 = dma.done [#allocation4], 128
    $region45: #{tpu_custom_call.1} parent=1 // pred_fallthru
      _
    %344 = vsyncpa [#allocation3], 1
    %345 = vsyncpa [#allocation6], 1
    %346 = vsyncpa [#allocation4], 1

</llo_original>
